<compile_context>
chip_gen: v7x
topology: tpu7x:2x2x1
jax: 0.10.0
libtpu: 0.0.40
codegen_flags: <defaults>
</compile_context>

<pallas_src>
import jax
import jax.numpy as jnp
from jax.experimental import pallas as pl
from jax.experimental.pallas import tpu as pltpu


def _round_up(a, b):
    return ((a + b - 1) // b) * b


def _make_blur_kernel(H, W, HWp):
    """Kernel over a (tbc, HWp) slab: each block row is one flattened (H, W) image."""

    def kernel(col_ref, x_ref, o_ref):
        x = x_ref[...].astype(jnp.float32)                     # (tbc, HWp), lane-dense
        colb = jnp.broadcast_to(col_ref[...], x.shape)         # per-pixel column index
        j = jax.lax.broadcasted_iota(jnp.int32, x.shape, 1)    # flat pixel index

        # Vertical [1, 2, 1] pass: neighbours live at +/- W along the flattened
        # lane axis. Rolls go to the XLU (no retiling copies); the wrap-around
        # values only ever land on the first / last image row, where the
        # reflect fixup overrides them anyway.
        x_up = pltpu.roll(x, shift=W, axis=1)            # x[j - W]
        x_dn = pltpu.roll(x, shift=HWp - W, axis=1)      # x[j + W]
        up_n = jnp.where(j < W, x_dn, x_up)              # reflect: row -1 -> row 1
        dn_n = jnp.where(j >= (H - 1) * W, x_up, x_dn)   # reflect: row H  -> row H-2
        v = up_n + 2.0 * x + dn_n

        # Horizontal [1, 2, 1] pass: neighbours at +/- 1 along lanes; wraps only
        # hit column 0 / W-1, which the reflect fixup overrides.
        v_l = pltpu.roll(v, shift=1, axis=1)             # v[j - 1]
        v_r = pltpu.roll(v, shift=HWp - 1, axis=1)       # v[j + 1]
        left_n = jnp.where(colb == 0, v_r, v_l)          # reflect: col -1 -> col 1
        right_n = jnp.where(colb == W - 1, v_l, v_r)     # reflect: col W  -> col W-2

        # Normalized 3x3 kernel sum is 16 -> single final scale.
        o_ref[...] = ((left_n + 2.0 * v + right_n) * 0.0625).astype(o_ref.dtype)

    return kernel


def blur(x):
    """x: (B, C, H, W) float array -> (B, C, H, W); identical to Blur.forward."""
    B, C, H, W = x.shape
    if H < 2 or W < 2:
        raise ValueError("Blur requires H >= 2 and W >= 2 (reflect padding of 1).")

    N, HW = B * C, H * W
    HWp = _round_up(HW, 128)               # lane-dense flattened image length
    itemsize = x.dtype.itemsize
    SUB = 32 // itemsize                    # sublane packing: 8 f32 / 16 bf16 / 32 i8

    x2 = x.reshape(N, HW)                   # free reshape in HBM
    if HWp != HW:                           # keep stores lane-dense for odd H*W
        x2 = jnp.pad(x2, ((0, 0), (0, HWp - HW)))
    col = (jnp.arange(HWp, dtype=jnp.int32) % W).reshape(1, HWp)

    # Generation-aware VMEM limit: ~48 MiB on v7x (64 MiB physical), 64 MiB on
    # v5e/v6e (128 MiB physical).
    try:
        vmem_cap = int(pltpu.get_tpu_info().vmem_capacity_bytes)
    except Exception:  # no TPU info available -> assume the smallest (v7x)
        vmem_cap = 64 << 20
    vmem_limit = min(64 << 20, (vmem_cap * 3) // 4)

    # Honest per-block footprint: padded lanes, double-buffered in + out in the
    # input dtype, plus ~6 slab-sized f32/i32 temporaries inside the kernel.
    lane_io = HWp * itemsize
    lane_f32 = HWp * 4
    TEMP_MULT = 6
    per_row = 2 * lane_io + 2 * lane_io + TEMP_MULT * lane_f32
    budget = vmem_limit // 2                # leave headroom for compiler scratch
    MIN_STEPS = 4                           # keep >=4 steps when N allows (pipelining,
                                            # v7x megacore sharding of the parallel axis)

    if N <= SUB:
        tbc = N                             # block == full leading dim (allowed)
    else:
        tbc = min(max(1, budget // per_row), pl.cdiv(N, MIN_STEPS))
        tbc = max(SUB, (tbc // SUB) * SUB)  # keep the sublane dim (8,128)-aligned
        tbc = min(tbc, (N // SUB) * SUB)
    steps = pl.cdiv(N, tbc)                 # partial last block is fine: rows are
                                            # independent images, OOB writes masked

    # If a tiny N / huge image forced a block past the budget, raise the limit
    # (still capped at 3/4 of physical VMEM).
    footprint = tbc * per_row + 2 * 8 * HWp * 4
    vmem_limit = max(vmem_limit, min((vmem_cap * 3) // 4, footprint + (2 << 20)))

    kernel = _make_blur_kernel(H, W, HWp)
    out = pl.pallas_call(
        kernel,
        out_shape=jax.ShapeDtypeStruct((N, HWp), x.dtype),
        grid=(steps,),
        in_specs=[
            pl.BlockSpec((1, HWp), lambda i: (0, 0)),       # column-index constants
            pl.BlockSpec((tbc, HWp), lambda i: (i, 0)),     # images
        ],
        out_specs=pl.BlockSpec((tbc, HWp), lambda i: (i, 0)),
        compiler_params=pltpu.CompilerParams(
            dimension_semantics=("parallel",),              # blocks fully independent
            vmem_limit_bytes=int(vmem_limit),
        ),
    )(col, x2)

    if HWp != HW:
        out = out[:, :HW]
    return out.reshape(B, C, H, W)


def _blur_reference(x):
    """Pure-JAX reference: reflect pad + explicit 3x3 normalized stencil."""
    B, C, H, W = x.shape
    f = jnp.array([1.0, 2.0, 1.0], dtype=jnp.float32)
    k = (f[:, None] * f[None, :]) / 16.0
    xp = jnp.pad(x.astype(jnp.float32), ((0, 0), (0, 0), (1, 1), (1, 1)),
                 mode="reflect")
    out = jnp.zeros((B, C, H, W), jnp.float32)
    for di in range(3):
        for dj in range(3):
            out = out + k[di, dj] * xp[:, :, di:di + H, dj:dj + W]
    return out.astype(x.dtype)


if __name__ == "__main__":
    key = jax.random.PRNGKey(0)
    # Primary shape from the module's usage, plus two shapes exercising the
    # partial-last-block path (B*C=10) and the lane-padding path (H*W=120<128).
    shapes = [(2, 4, 16, 16), (2, 5, 16, 16), (1, 3, 10, 12)]
    for idx, shp in enumerate(shapes):
        x = jax.random.normal(jax.random.fold_in(key, idx), shp, dtype=jnp.float32)
        y = jax.block_until_ready(blur(x))
        y_ref = _blur_reference(x)
        assert y.shape == x.shape
        assert jnp.allclose(y, y_ref, atol=1e-5, rtol=1e-5), f"Pallas blur mismatch {shp}"
    print("KERNEL_OK")
</pallas_src>

<mosaic_0001>
module attributes {stable_mosaic.version = 11 : i64} {
  func.func @kernel(%arg0: i32, %arg1: memref<1x256xi32, #tpu.memory_space<vmem>>, %arg2: memref<8x256xf32, #tpu.memory_space<vmem>>, %arg3: memref<8x256xf32, #tpu.memory_space<vmem>>) attributes {dimension_semantics = [#tpu.dimension_semantics<parallel>], iteration_bounds = array<i64: 1>, scalar_prefetch = 0 : i64, scratch_operands = 0 : i64, tpu.core_type = #tpu.core_type<tc>, window_params = [{pipeline_mode = #tpu.pipeline_mode<synchronous>, transform_indices = @transform_0, window_bounds = array<i64: 1, 256>}, {transform_indices = @transform_1, window_bounds = array<i64: 8, 256>}, {transform_indices = @transform_2, window_bounds = array<i64: 8, 256>}]} {
    %c0 = arith.constant 0 : index
    %c0_0 = arith.constant 0 : index
    %0 = vector.load %arg2[%c0, %c0_0] : memref<8x256xf32, #tpu.memory_space<vmem>>, vector<8x256xf32>
    %c0_1 = arith.constant 0 : index
    %c0_2 = arith.constant 0 : index
    %1 = vector.load %arg1[%c0_1, %c0_2] : memref<1x256xi32, #tpu.memory_space<vmem>>, vector<1x256xi32>
    %2 = vector.shape_cast %1 : vector<1x256xi32> to vector<1x256xi32>
    %3 = vector.broadcast %2 : vector<1x256xi32> to vector<8x256xi32>
    %4 = tpu.iota {dimensions = array<i32: 1>} : vector<8x256xi32>
    %c16_i32 = arith.constant 16 : i32
    %5 = tpu.dynamic_rotate %0 by %c16_i32 dim 1 : vector<8x256xf32>, i32 -> vector<8x256xf32>
    %c240_i32 = arith.constant 240 : i32
    %6 = tpu.dynamic_rotate %0 by %c240_i32 dim 1 : vector<8x256xf32>, i32 -> vector<8x256xf32>
    %c16_i32_3 = arith.constant 16 : i32
    %7 = vector.broadcast %c16_i32_3 : i32 to vector<8x256xi32>
    %8 = arith.cmpi slt, %4, %7 : vector<8x256xi32>
    %9 = arith.select %8, %6, %5 : vector<8x256xi1>, vector<8x256xf32>
    %c240_i32_4 = arith.constant 240 : i32
    %10 = vector.broadcast %c240_i32_4 : i32 to vector<8x256xi32>
    %11 = arith.cmpi sge, %4, %10 : vector<8x256xi32>
    %12 = arith.select %11, %5, %6 : vector<8x256xi1>, vector<8x256xf32>
    %cst = arith.constant 2.000000e+00 : f32
    %13 = vector.broadcast %cst : f32 to vector<8x256xf32>
    %14 = arith.mulf %13, %0 : vector<8x256xf32>
    %15 = arith.addf %9, %14 : vector<8x256xf32>
    %16 = arith.addf %15, %12 : vector<8x256xf32>
    %c1_i32 = arith.constant 1 : i32
    %17 = tpu.dynamic_rotate %16 by %c1_i32 dim 1 : vector<8x256xf32>, i32 -> vector<8x256xf32>
    %c255_i32 = arith.constant 255 : i32
    %18 = tpu.dynamic_rotate %16 by %c255_i32 dim 1 : vector<8x256xf32>, i32 -> vector<8x256xf32>
    %c0_i32 = arith.constant 0 : i32
    %19 = vector.broadcast %c0_i32 : i32 to vector<8x256xi32>
    %20 = arith.cmpi eq, %3, %19 : vector<8x256xi32>
    %21 = arith.select %20, %18, %17 : vector<8x256xi1>, vector<8x256xf32>
    %c15_i32 = arith.constant 15 : i32
    %22 = vector.broadcast %c15_i32 : i32 to vector<8x256xi32>
    %23 = arith.cmpi eq, %3, %22 : vector<8x256xi32>
    %24 = arith.select %23, %17, %18 : vector<8x256xi1>, vector<8x256xf32>
    %cst_5 = arith.constant 2.000000e+00 : f32
    %25 = vector.broadcast %cst_5 : f32 to vector<8x256xf32>
    %26 = arith.mulf %25, %16 : vector<8x256xf32>
    %27 = arith.addf %21, %26 : vector<8x256xf32>
    %28 = arith.addf %27, %24 : vector<8x256xf32>
    %cst_6 = arith.constant 6.250000e-02 : f32
    %29 = vector.broadcast %cst_6 : f32 to vector<8x256xf32>
    %30 = arith.mulf %28, %29 : vector<8x256xf32>
    %c0_7 = arith.constant 0 : index
    %c0_8 = arith.constant 0 : index
    %31 = vector.load %arg3[%c0_7, %c0_8] : memref<8x256xf32, #tpu.memory_space<vmem>>, vector<8x256xf32>
    tpu.vector_store %arg3[%c0_7, %c0_8], %30 {strides = array<i32>} : memref<8x256xf32, #tpu.memory_space<vmem>>, vector<8x256xf32>,
    return
  }
  func.func @transform_0(%arg0: i32) -> (i32, i32) {
    %c0_i32 = arith.constant 0 : i32
    %c0_i32_0 = arith.constant 0 : i32
    %c0_i32_1 = arith.constant 0 : i32
    return %c0_i32, %c0_i32_0 : i32, i32
  }
  func.func @transform_1(%arg0: i32) -> (i32, i32) {
    %c0_i32 = arith.constant 0 : i32
    %c0_i32_0 = arith.constant 0 : i32
    return %arg0, %c0_i32 : i32, i32
  }
  func.func @transform_2(%arg0: i32) -> (i32, i32) {
    %c0_i32 = arith.constant 0 : i32
    %c0_i32_0 = arith.constant 0 : i32
    return %arg0, %c0_i32 : i32, i32
  }
}

</mosaic_0001>

<llo_original>
// kernel: tpu_custom_call.1
$region0: #{tpu_custom_call.1}
  #allocation0 [shape = 'u32[]', space=smem, size = 0x4, offset = 0x4, fixed_abs, tag = 'smem constant byte address 0x4 - core index']
  #allocation1 [shape = 'u32[144,128]{1,0:T(1,128)}', space=vmem, size = 0x12000, scoped, tag = 'internal scratch']
  %s0 = inlined_call_operand.hbm [shape: s32[1,256], index: 0, kind: input, shape index: {}]
  %s1 = inlined_call_operand.hbm [shape: f32[8,256], index: 1, kind: input, shape index: {}]
  %s2 = inlined_call_operand.hbm [shape: f32[8,256], index: 2, kind: output, shape index: {}]
  %s3 = sld [smem:[#allocation0]]
  $region26: #{tpu_custom_call.1} parent=0
    _
  %s5 = ssub.s32 1, %s3
  %s6 = scalar_select 0, %s5, %s3
  $region1: #{tpu_custom_call.1} parent=0
    #allocation2 [shape = 'u8[1024]{0}', space=vmem, size = 0x400, scoped, tag = 'input window, operand 0, single buffered']
    #allocation3 [shape = 's32[1]{0}', space=sflag, size = 0x4, scoped, tag = 'scoped memory for tpu_custom_call.1']
    #allocation4 [shape = 's32[1]{0}', space=sflag, size = 0x4, scoped, tag = 'scoped memory for tpu_custom_call.1']
    #allocation5 [shape = 'u8[8192]{0}', space=vmem, size = 0x2000, scoped, tag = 'input window, operand 1, single buffered']
    #allocation6 [shape = 's32[1]{0}', space=sflag, size = 0x4, scoped, tag = 'scoped memory for tpu_custom_call.1']
    #allocation7 [shape = 'u8[8192]{0}', space=vmem, size = 0x2000, scoped, tag = 'output window, operand 0, single buffered']
    %7 = vsyncpa [#allocation3], 0
    %8 = vsyncpa [#allocation6], 0
    %9 = vsyncpa [#allocation4], 0
    // Predicated region
    $region2: #{tpu_custom_call.1} parent=1 // pred_check
      _
    $region3: #{tpu_custom_call.1} parent=1 // pred_check_branch
      %11 = sbr.rel (0) target = $region5
    $region4: #{tpu_custom_call.1} parent=1 // pred_region
      %s13 = ssub.s32 32, 32
      %14 = vsyncadd [#allocation3], %s13
      %s16 = sshll.u32 [#allocation2], 4
      %s17 = int_to_ptr.vmem [resolvable:$true] %s16
      %19 = dma.hbm_to_vmem [thread:$0]  %s0, 32, %s17, [#allocation3]
    $region5: #{tpu_custom_call.1} parent=1 // pred_fallthru
      _
    // Predicated region
    $region6: #{tpu_custom_call.1} parent=1 // pred_check
      _
    $region7: #{tpu_custom_call.1} parent=1 // pred_check_branch
      %21 = sbr.rel (0) target = $region9
    $region8: #{tpu_custom_call.1} parent=1 // pred_region
      %s23 = ssub.s32 256, 256
      %24 = vsyncadd [#allocation6], %s23
      %s26 = sshll.u32 [#allocation5], 4
      %s27 = int_to_ptr.vmem [resolvable:$true] %s26
      %29 = dma.hbm_to_vmem [thread:$0]  %s1, 256, %s27, [#allocation6]
    $region9: #{tpu_custom_call.1} parent=1 // pred_fallthru
      _
    // Predicated region
    $region10: #{tpu_custom_call.1} parent=1 // pred_check
      _
    $region11: #{tpu_custom_call.1} parent=1 // pred_check_branch
      %31 = sbr.rel (0) target = $region13
    $region12: #{tpu_custom_call.1} parent=1 // pred_region
      %32 = dma.done [#allocation3], 32
    $region13: #{tpu_custom_call.1} parent=1 // pred_fallthru
      _
    // Predicated region
    $region14: #{tpu_custom_call.1} parent=1 // pred_check
      _
    $region15: #{tpu_custom_call.1} parent=1 // pred_check_branch
      %34 = sbr.rel (0) target = $region17
    $region16: #{tpu_custom_call.1} parent=1 // pred_region
      %35 = dma.done [#allocation6], 256
    $region17: #{tpu_custom_call.1} parent=1 // pred_fallthru
      _
    %v36 = vld [vmem:[#allocation5] sm:$0xff]
    %v37 = vld [vmem:[#allocation5 + $0x8] sm:$0xff]
    %v38 = vld [vmem:[#allocation2] sm:$0x3]
    %v39 = vlaneseq
    %v40 = vshrl.u32 %v39, 7
    %v41 = vsub.s32 0, %v40
    %v42 = vrot.slane %v38, %v41
    %v43 = vlaneseq
    %v44 = vshrl.u32 %v43, 7
    %v45 = vsub.s32 1, %v44
    %v46 = vrot.slane %v38, %v45
    %v47 = vlaneseq
    %v48 = vand.u32 %v47, 127
    %v49 = vadd.s32 %v48, 128
    %50 = vrot.lane.b32.xlu0 %v36, 16
    %v51 = vpop.permute.xlu0 %50
    %52 = vrot.lane.b32.xlu0 %v37, 16
    %v53 = vpop.permute.xlu0 %52
    %vm54 = vcmp.lt.s32.totalorder %v48, 16
    %v55 = vsel %vm54, %v51, %v53
    %v56 = vsel %vm54, %v53, %v51
    %57 = vrot.lane.b32.xlu0 %v36, 112
    %v58 = vpop.permute.xlu0 %57
    %59 = vrot.lane.b32.xlu0 %v37, 112
    %v60 = vpop.permute.xlu0 %59
    %vm61 = vcmp.lt.s32.totalorder %v48, 112
    %v62 = vsel %vm61, %v58, %v60
    %v63 = vsel %vm61, %v60, %v58
    %vm64 = vcmp.lt.s32.totalorder %v49, 16
    %v65 = vsel %vm54, %v62, %v56
    %v66 = vsel %vm64, %v63, %v55
    %vm67 = vcmp.ge.s32.totalorder %v48, 240
    %vm68 = vcmp.ge.s32.totalorder %v49, 240
    %v69 = vsel %vm67, %v56, %v62
    %v70 = vsel %vm68, %v55, %v63
    %v71 = vmul.f32 %v36, 2.0
    %v72 = vmul.f32 %v37, 2.0
    %v73 = vadd.f32 %v65, %v71
    %v74 = vadd.f32 %v66, %v72
    %v75 = vadd.f32 %v73, %v69
    %v76 = vadd.f32 %v74, %v70
    %77 = vrot.lane.b32.xlu0 %v75, 1
    %v78 = vpop.permute.xlu0 %77
    %79 = vrot.lane.b32.xlu0 %v76, 1
    %v80 = vpop.permute.xlu0 %79
    %vm81 = vcmp.lt.s32.totalorder %v48, 1
    %v82 = vsel %vm81, %v78, %v80
    %v83 = vsel %vm81, %v80, %v78
    %84 = vrot.lane.b32.xlu0 %v75, 127
    %v85 = vpop.permute.xlu0 %84
    %86 = vrot.lane.b32.xlu0 %v76, 127
    %v87 = vpop.permute.xlu0 %86
    %vm88 = vcmp.lt.s32.totalorder %v48, 127
    %v89 = vsel %vm88, %v85, %v87
    %v90 = vsel %vm88, %v87, %v85
    %vm91 = vcmp.eq.s32.totalorder %v42, 0
    %vm92 = vcmp.eq.s32.totalorder %v46, 0
    %v93 = vsel %vm91, %v89, %v83
    %v94 = vsel %vm92, %v90, %v82
    %vm95 = vcmp.eq.s32.totalorder %v42, 15
    %vm96 = vcmp.eq.s32.totalorder %v46, 15
    %v97 = vsel %vm95, %v83, %v89
    %v98 = vsel %vm96, %v82, %v90
    %v99 = vmul.f32 %v75, 2.0
    %v100 = vmul.f32 %v76, 2.0
    %v101 = vadd.f32 %v93, %v99
    %v102 = vadd.f32 %v94, %v100
    %v103 = vadd.f32 %v101, %v97
    %v104 = vadd.f32 %v102, %v98
    %v105 = vmul.f32 %v103, 0.0625
    %v106 = vmul.f32 %v104, 0.0625
    %107 = vst [vmem:[#allocation7] sm:$0xff] %v105
    %108 = vst [vmem:[#allocation7 + $0x8] sm:$0xff] %v106
    // Predicated region
    $region18: #{tpu_custom_call.1} parent=1 // pred_check
      _
    $region19: #{tpu_custom_call.1} parent=1 // pred_check_branch
      %110 = sbr.rel (0) target = $region21
    $region20: #{tpu_custom_call.1} parent=1 // pred_region
      %s112 = ssub.s32 256, 256
      %113 = vsyncadd [#allocation4], %s112
      %s115 = sshll.u32 [#allocation7], 4
      %s116 = int_to_ptr.vmem [resolvable:$true] %s115
      %118 = dma.vmem_to_hbm [thread:$0]  %s116, 256, %s2, [#allocation4]
    $region21: #{tpu_custom_call.1} parent=1 // pred_fallthru
      _
    // Predicated region
    $region22: #{tpu_custom_call.1} parent=1 // pred_check
      _
    $region23: #{tpu_custom_call.1} parent=1 // pred_check_branch
      %120 = sbr.rel (0) target = $region25
    $region24: #{tpu_custom_call.1} parent=1 // pred_region
      %121 = dma.done [#allocation4], 256
    $region25: #{tpu_custom_call.1} parent=1 // pred_fallthru
      _
    %122 = vsyncpa [#allocation3], 1
    %123 = vsyncpa [#allocation6], 1
    %124 = vsyncpa [#allocation4], 1

</llo_original>
